<compile_context>
chip_gen: v6e
topology: v6e:2x2x1
jax: 0.10.0
libtpu: 0.0.40
codegen_flags: <defaults>
</compile_context>

<pallas_src>
import functools

import jax
import jax.numpy as jnp
from jax.experimental import pallas as pl
from jax.experimental.pallas import tpu as pltpu

BN_EPS = 1e-5


def _dense_relu(h, w_ref, b_ref):
    # Linear (bf16 x bf16 -> f32 accumulate on the MXU) + folded-BN bias + ReLU.
    y = jnp.dot(h.astype(w_ref.dtype), w_ref[...],
                preferred_element_type=jnp.float32) + b_ref[...]
    return jnp.maximum(y, 0.0)


def wdl_kernel(wide_ref, x_ref,
               w1, b1, w2, b2, w3, b3,
               wo_row, bo,
               out_ref):
    # Deep part: 3 x (Linear[BN-folded] + ReLU).
    h = _dense_relu(x_ref[...], w1, b1)
    h = _dense_relu(h, w2, b2)
    h = _dense_relu(h, w3, b3)
    # Output layer is an N=1 matvec: do it on the VPU + lane reduce instead of
    # pushing a nearly empty tile through the MXU.
    deep = jnp.sum(h * wo_row[...], axis=-1, keepdims=True) + bo[...]
    # Wide part was precomputed per-row in the wrapper.
    out_ref[...] = wide_ref[...] + deep


def _fold_bn(w, b, g, be, m, v):
    """Fold eval-mode BatchNorm1d into the preceding Linear (exact, in f32)."""
    scale = g * jax.lax.rsqrt(v + BN_EPS)        # (1, dout)
    return w * scale, (b - m) * scale + be


def make_params(field_dims, embed_dim, mlp_layers, key):
    """Deterministic synthetic parameters (shapes follow the PyTorch __init__)."""
    total = int(sum(field_dims))
    embed_out = len(field_dims) * embed_dim
    keys = jax.random.split(key, 32)
    ki = iter(range(32))

    def nxt():
        return keys[next(ki)]

    params = {}
    # FeaturesLinear: nn.Embedding(sum(field_dims), 1) + bias(1,)
    params["lr_weight"] = 0.05 * jax.random.normal(nxt(), (total,), jnp.float32)
    params["lr_bias"] = jnp.zeros((1, 1), jnp.float32)
    # FeaturesEmbedding: nn.Embedding(sum(field_dims), embed_dim)
    params["emb_weight"] = (
        jax.random.normal(nxt(), (total, embed_dim), jnp.float32)
        * (1.0 / jnp.sqrt(jnp.float32(embed_dim)))
    )
    # offsets = cumsum of field_dims with leading 0
    offsets = jnp.concatenate(
        [jnp.zeros((1,), jnp.int32), jnp.cumsum(jnp.array(field_dims, jnp.int32))[:-1]]
    )
    params["offsets"] = offsets

    # MLP: Linear -> BN -> ReLU -> Dropout, x3, then Linear(->1)
    dims = [embed_out] + list(mlp_layers)
    layers = []
    for li in range(len(mlp_layers)):
        din, dout = dims[li], dims[li + 1]
        w = jax.random.normal(nxt(), (din, dout), jnp.float32) * (1.0 / jnp.sqrt(jnp.float32(din)))
        b = 0.01 * jax.random.normal(nxt(), (1, dout), jnp.float32)
        gamma = 1.0 + 0.1 * jax.random.normal(nxt(), (1, dout), jnp.float32)
        beta = 0.1 * jax.random.normal(nxt(), (1, dout), jnp.float32)
        rmean = 0.1 * jax.random.normal(nxt(), (1, dout), jnp.float32)
        rvar = 0.5 + jax.random.uniform(nxt(), (1, dout), jnp.float32)
        layers.append((w, b, gamma, beta, rmean, rvar))
    params["layers"] = layers
    params["w_out"] = jax.random.normal(nxt(), (dims[-1], 1), jnp.float32) * (
        1.0 / jnp.sqrt(jnp.float32(dims[-1]))
    )
    params["b_out"] = 0.01 * jax.random.normal(nxt(), (1, 1), jnp.float32)
    return params


@functools.partial(jax.jit, static_argnames=("tb",))
def wide_and_deep_forward(x, params, tb=None):
    """x: (B, F) int32 field indices -> (B, 1) float32 prediction."""
    B, F = x.shape
    if tb is None:
        # Single tile for small batches; 256-row tiles otherwise (sweep 256-1024
        # per generation; bf16 needs tb to be a multiple of 16 when tiling).
        tb = B if B <= 256 else 256

    idx = x + params["offsets"][None, :]                      # (B, F)

    # Wide part computed here (XLA fuses the tiny sum into the gather),
    # passed to the kernel as a single per-row addend.
    wide = (jnp.sum(params["lr_weight"][idx], axis=1, keepdims=True)
            + params["lr_bias"]).astype(jnp.float32)          # (B, 1)

    # Deep-part input: flattened embedding, streamed to the kernel in bf16.
    # TODO(synk): x_flat still round-trips through HBM; a fully fused version
    # would gather the embedding rows inside the kernel via manual DMA.
    x_flat = params["emb_weight"][idx].reshape(B, -1).astype(jnp.bfloat16)  # (B, F*D)
    e0 = x_flat.shape[1]

    # Fold BN into the linear layers; cast weights to bf16, keep biases in f32.
    folded = []
    for (w, b, g, be, m, v) in params["layers"]:
        wf, bf = _fold_bn(w, b, g, be, m, v)
        folded.append((wf.astype(jnp.bfloat16), bf.astype(jnp.float32)))
    (w1, b1), (w2, b2), (w3, b3) = folded
    wo_row = params["w_out"].reshape(1, -1).astype(jnp.float32)   # (1, H)
    bo = params["b_out"].astype(jnp.float32)                      # (1, 1)

    def row_spec(cols):
        return pl.BlockSpec((tb, cols), lambda i: (i, 0))

    def full_spec(a):
        return pl.BlockSpec(a.shape, lambda i: (0,) * a.ndim)

    grid = (pl.cdiv(B, tb),)

    in_specs = [row_spec(1),            # wide (B, 1)
                row_spec(e0),           # x_flat (B, F*D)
                full_spec(w1), full_spec(b1),
                full_spec(w2), full_spec(b2),
                full_spec(w3), full_spec(b3),
                full_spec(wo_row), full_spec(bo)]

    out = pl.pallas_call(
        wdl_kernel,
        out_shape=jax.ShapeDtypeStruct((B, 1), jnp.float32),
        grid_spec=pltpu.PrefetchScalarGridSpec(
            num_scalar_prefetch=0,
            grid=grid,
            in_specs=in_specs,
            out_specs=pl.BlockSpec((tb, 1), lambda i: (i, 0)),
        ),
        compiler_params=pltpu.CompilerParams(
            dimension_semantics=("parallel",)),
    )(wide, x_flat, w1, b1, w2, b2, w3, b3, wo_row, bo)
    return out


def reference_forward(x, params):
    """Pure-JAX f32 reference (eval-mode PyTorch semantics, un-folded BN)."""
    idx = x + params["offsets"][None, :]
    wide = jnp.sum(params["lr_weight"][idx], axis=1, keepdims=True) + params["lr_bias"]
    h = params["emb_weight"][idx].reshape(x.shape[0], -1).astype(jnp.float32)
    for (w, b, g, be, m, v) in params["layers"]:
        y = h @ w + b
        y = (y - m) / jnp.sqrt(v + BN_EPS) * g + be
        h = jnp.maximum(y, 0.0)
    deep = h @ params["w_out"] + params["b_out"]
    return wide + deep


if __name__ == "__main__":
    # Small, module-consistent shapes.
    field_dims = (10, 20, 30, 40)   # 4 sparse fields
    embed_dim = 16                  # -> embed_output_dim = 64
    mlp_layers = (64, 64, 64)
    batch = 64

    key = jax.random.PRNGKey(0)
    k_params, k_x = jax.random.split(key)
    params = make_params(field_dims, embed_dim, mlp_layers, k_params)

    # Integer field indices, each field within its own cardinality.
    maxvals = jnp.array(field_dims, jnp.int32)[None, :]
    x = (jax.random.randint(k_x, (batch, len(field_dims)), 0, 10_000, jnp.int32)
         % maxvals).astype(jnp.int32)

    # tb=32 here exercises a >1-step grid (and megacore sharding on v7x).
    y = wide_and_deep_forward(x, params, tb=32)
    y = jax.block_until_ready(y)

    y_ref = reference_forward(x, params)
    assert y.shape == (batch, 1)
    # bf16 hot path vs f32 reference: relaxed tolerance.
    assert jnp.allclose(y, y_ref, rtol=5e-2, atol=5e-2), (y, y_ref)

    print("KERNEL_OK")
</pallas_src>

<mosaic_0001>
module attributes {stable_mosaic.version = 11 : i64} {
  func.func @wdl_kernel(%arg0: i32, %arg1: memref<32x1xf32, #tpu.memory_space<vmem>>, %arg2: memref<32x64xbf16, #tpu.memory_space<vmem>>, %arg3: memref<64x64xbf16, #tpu.memory_space<vmem>>, %arg4: memref<1x64xf32, #tpu.memory_space<vmem>>, %arg5: memref<64x64xbf16, #tpu.memory_space<vmem>>, %arg6: memref<1x64xf32, #tpu.memory_space<vmem>>, %arg7: memref<64x64xbf16, #tpu.memory_space<vmem>>, %arg8: memref<1x64xf32, #tpu.memory_space<vmem>>, %arg9: memref<1x64xf32, #tpu.memory_space<vmem>>, %arg10: memref<1x1xf32, #tpu.memory_space<vmem>>, %arg11: memref<32x1xf32, #tpu.memory_space<vmem>>) attributes {dimension_semantics = [#tpu.dimension_semantics<parallel>], iteration_bounds = array<i64: 2>, scalar_prefetch = 0 : i64, scratch_operands = 0 : i64, tpu.core_type = #tpu.core_type<tc>, window_params = [{transform_indices = @transform_0, window_bounds = array<i64: 32, 1>}, {transform_indices = @transform_1, window_bounds = array<i64: 32, 64>}, {pipeline_mode = #tpu.pipeline_mode<synchronous>, transform_indices = @transform_2, window_bounds = array<i64: 64, 64>}, {pipeline_mode = #tpu.pipeline_mode<synchronous>, transform_indices = @transform_3, window_bounds = array<i64: 1, 64>}, {pipeline_mode = #tpu.pipeline_mode<synchronous>, transform_indices = @transform_4, window_bounds = array<i64: 64, 64>}, {pipeline_mode = #tpu.pipeline_mode<synchronous>, transform_indices = @transform_5, window_bounds = array<i64: 1, 64>}, {pipeline_mode = #tpu.pipeline_mode<synchronous>, transform_indices = @transform_6, window_bounds = array<i64: 64, 64>}, {pipeline_mode = #tpu.pipeline_mode<synchronous>, transform_indices = @transform_7, window_bounds = array<i64: 1, 64>}, {pipeline_mode = #tpu.pipeline_mode<synchronous>, transform_indices = @transform_8, window_bounds = array<i64: 1, 64>}, {pipeline_mode = #tpu.pipeline_mode<synchronous>, transform_indices = @transform_9, window_bounds = array<i64: 1, 1>}, {transform_indices = @transform_10, window_bounds = array<i64: 32, 1>}]} {
    %c0 = arith.constant 0 : index
    %c0_0 = arith.constant 0 : index
    %0 = vector.load %arg2[%c0, %c0_0] : memref<32x64xbf16, #tpu.memory_space<vmem>>, vector<32x64xbf16>
    %c0_1 = arith.constant 0 : index
    %c0_2 = arith.constant 0 : index
    %1 = vector.load %arg3[%c0_1, %c0_2] : memref<64x64xbf16, #tpu.memory_space<vmem>>, vector<64x64xbf16>
    %cst = arith.constant dense<0.000000e+00> : vector<32x64xf32>
    %2 = tpu.matmul %0, %1, %cst {dimension_numbers = #tpu.dot_dimension_numbers<[1], [0], [0], [1], [0, 0, 1, 1], [], []>} : vector<32x64xbf16>, vector<64x64xbf16>, vector<32x64xf32> -> vector<32x64xf32>
    %c0_3 = arith.constant 0 : index
    %c0_4 = arith.constant 0 : index
    %3 = vector.load %arg4[%c0_3, %c0_4] : memref<1x64xf32, #tpu.memory_space<vmem>>, vector<1x64xf32>
    %4 = vector.broadcast %3 : vector<1x64xf32> to vector<32x64xf32>
    %5 = arith.addf %2, %4 : vector<32x64xf32>
    %cst_5 = arith.constant 0.000000e+00 : f32
    %6 = vector.broadcast %cst_5 : f32 to vector<32x64xf32>
    %7 = arith.maximumf %5, %6 : vector<32x64xf32>
    %8 = arith.truncf %7 : vector<32x64xf32> to vector<32x64xbf16>
    %c0_6 = arith.constant 0 : index
    %c0_7 = arith.constant 0 : index
    %9 = vector.load %arg5[%c0_6, %c0_7] : memref<64x64xbf16, #tpu.memory_space<vmem>>, vector<64x64xbf16>
    %cst_8 = arith.constant dense<0.000000e+00> : vector<32x64xf32>
    %10 = tpu.matmul %8, %9, %cst_8 {dimension_numbers = #tpu.dot_dimension_numbers<[1], [0], [0], [1], [0, 0, 1, 1], [], []>} : vector<32x64xbf16>, vector<64x64xbf16>, vector<32x64xf32> -> vector<32x64xf32>
    %c0_9 = arith.constant 0 : index
    %c0_10 = arith.constant 0 : index
    %11 = vector.load %arg6[%c0_9, %c0_10] : memref<1x64xf32, #tpu.memory_space<vmem>>, vector<1x64xf32>
    %12 = vector.broadcast %11 : vector<1x64xf32> to vector<32x64xf32>
    %13 = arith.addf %10, %12 : vector<32x64xf32>
    %cst_11 = arith.constant 0.000000e+00 : f32
    %14 = vector.broadcast %cst_11 : f32 to vector<32x64xf32>
    %15 = arith.maximumf %13, %14 : vector<32x64xf32>
    %16 = arith.truncf %15 : vector<32x64xf32> to vector<32x64xbf16>
    %c0_12 = arith.constant 0 : index
    %c0_13 = arith.constant 0 : index
    %17 = vector.load %arg7[%c0_12, %c0_13] : memref<64x64xbf16, #tpu.memory_space<vmem>>, vector<64x64xbf16>
    %cst_14 = arith.constant dense<0.000000e+00> : vector<32x64xf32>
    %18 = tpu.matmul %16, %17, %cst_14 {dimension_numbers = #tpu.dot_dimension_numbers<[1], [0], [0], [1], [0, 0, 1, 1], [], []>} : vector<32x64xbf16>, vector<64x64xbf16>, vector<32x64xf32> -> vector<32x64xf32>
    %c0_15 = arith.constant 0 : index
    %c0_16 = arith.constant 0 : index
    %19 = vector.load %arg8[%c0_15, %c0_16] : memref<1x64xf32, #tpu.memory_space<vmem>>, vector<1x64xf32>
    %20 = vector.broadcast %19 : vector<1x64xf32> to vector<32x64xf32>
    %21 = arith.addf %18, %20 : vector<32x64xf32>
    %cst_17 = arith.constant 0.000000e+00 : f32
    %22 = vector.broadcast %cst_17 : f32 to vector<32x64xf32>
    %23 = arith.maximumf %21, %22 : vector<32x64xf32>
    %c0_18 = arith.constant 0 : index
    %c0_19 = arith.constant 0 : index
    %24 = vector.load %arg9[%c0_18, %c0_19] : memref<1x64xf32, #tpu.memory_space<vmem>>, vector<1x64xf32>
    %25 = vector.broadcast %24 : vector<1x64xf32> to vector<32x64xf32>
    %26 = arith.mulf %23, %25 : vector<32x64xf32>
    %cst_20 = arith.constant dense<0.000000e+00> : vector<32xf32>
    %27 = vector.multi_reduction <add>, %26, %cst_20 [1] : vector<32x64xf32> to vector<32xf32>
    %28 = vector.shape_cast %27 : vector<32xf32> to vector<32x1xf32>
    %c0_21 = arith.constant 0 : index
    %c0_22 = arith.constant 0 : index
    %29 = vector.load %arg10[%c0_21, %c0_22] : memref<1x1xf32, #tpu.memory_space<vmem>>, vector<1x1xf32>
    %30 = vector.broadcast %29 : vector<1x1xf32> to vector<32x1xf32>
    %31 = arith.addf %28, %30 : vector<32x1xf32>
    %c0_23 = arith.constant 0 : index
    %c0_24 = arith.constant 0 : index
    %32 = vector.load %arg1[%c0_23, %c0_24] : memref<32x1xf32, #tpu.memory_space<vmem>>, vector<32x1xf32>
    %33 = arith.addf %32, %31 : vector<32x1xf32>
    %c0_25 = arith.constant 0 : index
    %c0_26 = arith.constant 0 : index
    %34 = vector.load %arg11[%c0_25, %c0_26] : memref<32x1xf32, #tpu.memory_space<vmem>>, vector<32x1xf32>
    tpu.vector_store %arg11[%c0_25, %c0_26], %33 {strides = array<i32>} : memref<32x1xf32, #tpu.memory_space<vmem>>, vector<32x1xf32>,
    return
  }
  func.func @transform_0(%arg0: i32) -> (i32, i32) {
    %c0_i32 = arith.constant 0 : i32
    %c0_i32_0 = arith.constant 0 : i32
    return %arg0, %c0_i32 : i32, i32
  }
  func.func @transform_1(%arg0: i32) -> (i32, i32) {
    %c0_i32 = arith.constant 0 : i32
    %c0_i32_0 = arith.constant 0 : i32
    return %arg0, %c0_i32 : i32, i32
  }
  func.func @transform_2(%arg0: i32) -> (i32, i32) {
    %c0_i32 = arith.constant 0 : i32
    %c0_i32_0 = arith.constant 0 : i32
    %c0_i32_1 = arith.constant 0 : i32
    return %c0_i32, %c0_i32_0 : i32, i32
  }
  func.func @transform_3(%arg0: i32) -> (i32, i32) {
    %c0_i32 = arith.constant 0 : i32
    %c0_i32_0 = arith.constant 0 : i32
    %c0_i32_1 = arith.constant 0 : i32
    return %c0_i32, %c0_i32_0 : i32, i32
  }
  func.func @transform_4(%arg0: i32) -> (i32, i32) {
    %c0_i32 = arith.constant 0 : i32
    %c0_i32_0 = arith.constant 0 : i32
    %c0_i32_1 = arith.constant 0 : i32
    return %c0_i32, %c0_i32_0 : i32, i32
  }
  func.func @transform_5(%arg0: i32) -> (i32, i32) {
    %c0_i32 = arith.constant 0 : i32
    %c0_i32_0 = arith.constant 0 : i32
    %c0_i32_1 = arith.constant 0 : i32
    return %c0_i32, %c0_i32_0 : i32, i32
  }
  func.func @transform_6(%arg0: i32) -> (i32, i32) {
    %c0_i32 = arith.constant 0 : i32
    %c0_i32_0 = arith.constant 0 : i32
    %c0_i32_1 = arith.constant 0 : i32
    return %c0_i32, %c0_i32_0 : i32, i32
  }
  func.func @transform_7(%arg0: i32) -> (i32, i32) {
    %c0_i32 = arith.constant 0 : i32
    %c0_i32_0 = arith.constant 0 : i32
    %c0_i32_1 = arith.constant 0 : i32
    return %c0_i32, %c0_i32_0 : i32, i32
  }
  func.func @transform_8(%arg0: i32) -> (i32, i32) {
    %c0_i32 = arith.constant 0 : i32
    %c0_i32_0 = arith.constant 0 : i32
    %c0_i32_1 = arith.constant 0 : i32
    return %c0_i32, %c0_i32_0 : i32, i32
  }
  func.func @transform_9(%arg0: i32) -> (i32, i32) {
    %c0_i32 = arith.constant 0 : i32
    %c0_i32_0 = arith.constant 0 : i32
    %c0_i32_1 = arith.constant 0 : i32
    return %c0_i32, %c0_i32_0 : i32, i32
  }
  func.func @transform_10(%arg0: i32) -> (i32, i32) {
    %c0_i32 = arith.constant 0 : i32
    %c0_i32_0 = arith.constant 0 : i32
    return %arg0, %c0_i32 : i32, i32
  }
}

</mosaic_0001>

<llo_original>
// kernel: wide_and_deep_forward.1
$region0: #{wide_and_deep_forward.1}
  #allocation0 [shape = 'u32[]', space=smem, size = 0x4, offset = 0x4, fixed_abs, tag = 'smem constant byte address 0x4 - core index']
  #allocation1 [shape = 'u32[144,128]{1,0:T(1,128)}', space=vmem, size = 0x12000, scoped, tag = 'internal scratch']
  #allocation2 [shape = 'f32[1,1]{1,0:T(1,128)S(1)}', space=vmem, size = 0x200, scoped, tag = 'scoped memory for wide_and_deep_forward.1']
  %s0 = inlined_call_operand.vmem [shape: f32[64,1], index: 0, kind: input, shape index: {}]
  %s1 = inlined_call_operand.vmem [shape: bf16[64,64], index: 1, kind: input, shape index: {}]
  %s2 = inlined_call_operand.vmem [shape: bf16[64,64], index: 2, kind: input, shape index: {}]
  %s3 = inlined_call_operand.vmem [shape: f32[1,64], index: 3, kind: input, shape index: {}]
  %s4 = inlined_call_operand.vmem [shape: bf16[64,64], index: 4, kind: input, shape index: {}]
  %s5 = inlined_call_operand.vmem [shape: f32[1,64], index: 5, kind: input, shape index: {}]
  %s6 = inlined_call_operand.vmem [shape: bf16[64,64], index: 6, kind: input, shape index: {}]
  %s7 = inlined_call_operand.vmem [shape: f32[1,64], index: 7, kind: input, shape index: {}]
  %s8 = inlined_call_operand.vmem [shape: f32[1,64], index: 8, kind: input, shape index: {}]
  %s9 = inlined_call_operand.<no memory space> [shape: f32[1,1], index: 9, kind: input, shape index: {}]
  %s10 = inlined_call_operand.vmem [shape: f32[64,1], index: 10, kind: output, shape index: {}]
  %s11 = sld [smem:[#allocation0]]
  $region73: #{wide_and_deep_forward.1} parent=0
    _
  %s13 = ssub.s32 1, %s11
  %s14 = scalar_select 0, %s13, %s11
  %v15 = vstv %s9
  %16 = vst [vmem:[#allocation2] sm:$0x1] %v15
  loop: start=0, step=1, limit=4
  $region2: #{wide_and_deep_forward.1} parent=0 // loop_pre_header
    _
  $region3: #{wide_and_deep_forward.1} parent=0 // loop_header
    %s18 = sphi 0, %s22
    %p19 = scmp.ge.s32.totalorder %s18, 4
    %s28 = sphi 0, %s30
    %s31 = sphi 0, %s28
    %s32 = sphi 0, %s31
    %s48 = sphi 0, %s32
    %s54 = sphi 0, %s56
    %s57 = sphi 0, %s54
    %s58 = sphi 0, %s57
    %s74 = sphi 0, %s58
    %s78 = sphi 0, %s78
    %s80 = sphi 0, %s78
    %s81 = sphi 0, %s80
    %s95 = sphi 0, %s81
    %s99 = sphi 0, %s99
    %s101 = sphi 0, %s99
    %s102 = sphi 0, %s101
    %s116 = sphi 0, %s102
    %s120 = sphi 0, %s120
    %s122 = sphi 0, %s120
    %s123 = sphi 0, %s122
    %s137 = sphi 0, %s123
    %s141 = sphi 0, %s141
    %s143 = sphi 0, %s141
    %s144 = sphi 0, %s143
    %s158 = sphi 0, %s144
    %s162 = sphi 0, %s162
    %s164 = sphi 0, %s162
    %s165 = sphi 0, %s164
    %s179 = sphi 0, %s165
    %s183 = sphi 0, %s183
    %s185 = sphi 0, %s183
    %s186 = sphi 0, %s185
    %s200 = sphi 0, %s186
    %s204 = sphi 0, %s204
    %s206 = sphi 0, %s204
    %s207 = sphi 0, %s206
    %s221 = sphi 0, %s207
    %s225 = sphi 0, %s225
    %s227 = sphi 0, %s225
    %s228 = sphi 0, %s227
    %s242 = sphi 0, %s228
    %s248 = sphi 0, %s250
    %s251 = sphi 0, %s248
    %s252 = sphi 0, %s251
    %s268 = sphi 0, %s252
  $region4: #{wide_and_deep_forward.1} parent=0 // loop_header_branch
    %21 = sbr.rel (%p19) target = $region8
  $region5: #{wide_and_deep_forward.1} parent=0 // loop_body
    %s23 = ssub.s32 %s18, 1
    %s24 = ssub.s32 %s18, 2
    %s25 = sadd.s32 %s18, 1
    %s26 = ssub.s32 %s18, %s25
    %p27 = scmp.eq.s32.totalorder %s26, 0
    %s29 = sadd.s32 %s28, 1
    %s30 = scalar_select %p27, %s28, %s29
    %p33 = pneg %p27
    %p34 = scmp.eq.s32.totalorder %s18, 1
    %p35 = por %p33, %p34
    %p36 = scmp.ne.s32.totalorder %s28, %s31
    %p37 = scmp.eq.s32.totalorder %s18, 0
    %p38 = por %p36, %p37
    %p39 = scmp.ne.s32.totalorder %s28, %s31
    %p40 = scmp.eq.s32.totalorder %s23, 1
    %p41 = por %p39, %p40
    %p42 = scmp.ne.s32.totalorder %s31, %s32
    %p43 = scmp.eq.s32.totalorder %s23, 0
    %p44 = por %p42, %p43
    %p45 = scmp.ne.s32.totalorder %s31, %s32
    %p46 = scmp.eq.s32.totalorder %s24, 1
    %p47 = por %p45, %p46
    %p49 = scmp.ne.s32.totalorder %s32, %s48
    %p50 = scmp.eq.s32.totalorder %s24, 0
    %p51 = por %p49, %p50
    %s52 = ssub.s32 %s18, %s25
    %p53 = scmp.eq.s32.totalorder %s52, 0
    %s55 = sadd.s32 %s54, 1
    %s56 = scalar_select %p53, %s54, %s55
    %p59 = pneg %p53
    %p60 = scmp.eq.s32.totalorder %s18, 1
    %p61 = por %p59, %p60
    %p62 = scmp.ne.s32.totalorder %s54, %s57
    %p63 = scmp.eq.s32.totalorder %s18, 0
    %p64 = por %p62, %p63
    %p65 = scmp.ne.s32.totalorder %s54, %s57
    %p66 = scmp.eq.s32.totalorder %s23, 1
    %p67 = por %p65, %p66
    %p68 = scmp.ne.s32.totalorder %s57, %s58
    %p69 = scmp.eq.s32.totalorder %s23, 0
    %p70 = por %p68, %p69
    %p71 = scmp.ne.s32.totalorder %s57, %s58
    %p72 = scmp.eq.s32.totalorder %s24, 1
    %p73 = por %p71, %p72
    %p75 = scmp.ne.s32.totalorder %s58, %s74
    %p76 = scmp.eq.s32.totalorder %s24, 0
    %p77 = por %p75, %p76
    %s79 = sadd.s32 %s78, 1
    %p82 = scmp.eq.s32.totalorder %s18, 1
    %p83 = scmp.ne.s32.totalorder %s78, %s80
    %p84 = scmp.eq.s32.totalorder %s18, 0
    %p85 = por %p83, %p84
    %p86 = scmp.ne.s32.totalorder %s78, %s80
    %p87 = scmp.eq.s32.totalorder %s23, 1
    %p88 = por %p86, %p87
    %p89 = scmp.ne.s32.totalorder %s80, %s81
    %p90 = scmp.eq.s32.totalorder %s23, 0
    %p91 = por %p89, %p90
    %p92 = scmp.ne.s32.totalorder %s80, %s81
    %p93 = scmp.eq.s32.totalorder %s24, 1
    %p94 = por %p92, %p93
    %p96 = scmp.ne.s32.totalorder %s81, %s95
    %p97 = scmp.eq.s32.totalorder %s24, 0
    %p98 = por %p96, %p97
    %s100 = sadd.s32 %s99, 1
    %p103 = scmp.eq.s32.totalorder %s18, 1
    %p104 = scmp.ne.s32.totalorder %s99, %s101
    %p105 = scmp.eq.s32.totalorder %s18, 0
    %p106 = por %p104, %p105
    %p107 = scmp.ne.s32.totalorder %s99, %s101
    %p108 = scmp.eq.s32.totalorder %s23, 1
    %p109 = por %p107, %p108
    %p110 = scmp.ne.s32.totalorder %s101, %s102
    %p111 = scmp.eq.s32.totalorder %s23, 0
    %p112 = por %p110, %p111
    %p113 = scmp.ne.s32.totalorder %s101, %s102
    %p114 = scmp.eq.s32.totalorder %s24, 1
    %p115 = por %p113, %p114
    %p117 = scmp.ne.s32.totalorder %s102, %s116
    %p118 = scmp.eq.s32.totalorder %s24, 0
    %p119 = por %p117, %p118
    %s121 = sadd.s32 %s120, 1
    %p124 = scmp.eq.s32.totalorder %s18, 1
    %p125 = scmp.ne.s32.totalorder %s120, %s122
    %p126 = scmp.eq.s32.totalorder %s18, 0
    %p127 = por %p125, %p126
    %p128 = scmp.ne.s32.totalorder %s120, %s122
    %p129 = scmp.eq.s32.totalorder %s23, 1
    %p130 = por %p128, %p129
    %p131 = scmp.ne.s32.totalorder %s122, %s123
    %p132 = scmp.eq.s32.totalorder %s23, 0
    %p133 = por %p131, %p132
    %p134 = scmp.ne.s32.totalorder %s122, %s123
    %p135 = scmp.eq.s32.totalorder %s24, 1
    %p136 = por %p134, %p135
    %p138 = scmp.ne.s32.totalorder %s123, %s137
    %p139 = scmp.eq.s32.totalorder %s24, 0
    %p140 = por %p138, %p139
    %s142 = sadd.s32 %s141, 1
    %p145 = scmp.eq.s32.totalorder %s18, 1
    %p146 = scmp.ne.s32.totalorder %s141, %s143
    %p147 = scmp.eq.s32.totalorder %s18, 0
    %p148 = por %p146, %p147
    %p149 = scmp.ne.s32.totalorder %s141, %s143
    %p150 = scmp.eq.s32.totalorder %s23, 1
    %p151 = por %p149, %p150
    %p152 = scmp.ne.s32.totalorder %s143, %s144
    %p153 = scmp.eq.s32.totalorder %s23, 0
    %p154 = por %p152, %p153
    %p155 = scmp.ne.s32.totalorder %s143, %s144
    %p156 = scmp.eq.s32.totalorder %s24, 1
    %p157 = por %p155, %p156
    %p159 = scmp.ne.s32.totalorder %s144, %s158
    %p160 = scmp.eq.s32.totalorder %s24, 0
    %p161 = por %p159, %p160
    %s163 = sadd.s32 %s162, 1
    %p166 = scmp.eq.s32.totalorder %s18, 1
    %p167 = scmp.ne.s32.totalorder %s162, %s164
    %p168 = scmp.eq.s32.totalorder %s18, 0
    %p169 = por %p167, %p168
    %p170 = scmp.ne.s32.totalorder %s162, %s164
    %p171 = scmp.eq.s32.totalorder %s23, 1
    %p172 = por %p170, %p171
    %p173 = scmp.ne.s32.totalorder %s164, %s165
    %p174 = scmp.eq.s32.totalorder %s23, 0
    %p175 = por %p173, %p174
    %p176 = scmp.ne.s32.totalorder %s164, %s165
    %p177 = scmp.eq.s32.totalorder %s24, 1
    %p178 = por %p176, %p177
    %p180 = scmp.ne.s32.totalorder %s165, %s179
    %p181 = scmp.eq.s32.totalorder %s24, 0
    %p182 = por %p180, %p181
    %s184 = sadd.s32 %s183, 1
    %p187 = scmp.eq.s32.totalorder %s18, 1
    %p188 = scmp.ne.s32.totalorder %s183, %s185
    %p189 = scmp.eq.s32.totalorder %s18, 0
    %p190 = por %p188, %p189
    %p191 = scmp.ne.s32.totalorder %s183, %s185
    %p192 = scmp.eq.s32.totalorder %s23, 1
    %p193 = por %p191, %p192
    %p194 = scmp.ne.s32.totalorder %s185, %s186
    %p195 = scmp.eq.s32.totalorder %s23, 0
    %p196 = por %p194, %p195
    %p197 = scmp.ne.s32.totalorder %s185, %s186
    %p198 = scmp.eq.s32.totalorder %s24, 1
    %p199 = por %p197, %p198
    %p201 = scmp.ne.s32.totalorder %s186, %s200
    %p202 = scmp.eq.s32.totalorder %s24, 0
    %p203 = por %p201, %p202
    %s205 = sadd.s32 %s204, 1
    %p208 = scmp.eq.s32.totalorder %s18, 1
    %p209 = scmp.ne.s32.totalorder %s204, %s206
    %p210 = scmp.eq.s32.totalorder %s18, 0
    %p211 = por %p209, %p210
    %p212 = scmp.ne.s32.totalorder %s204, %s206
    %p213 = scmp.eq.s32.totalorder %s23, 1
    %p214 = por %p212, %p213
    %p215 = scmp.ne.s32.totalorder %s206, %s207
    %p216 = scmp.eq.s32.totalorder %s23, 0
    %p217 = por %p215, %p216
    %p218 = scmp.ne.s32.totalorder %s206, %s207
    %p219 = scmp.eq.s32.totalorder %s24, 1
    %p220 = por %p218, %p219
    %p222 = scmp.ne.s32.totalorder %s207, %s221
    %p223 = scmp.eq.s32.totalorder %s24, 0
    %p224 = por %p222, %p223
    %s226 = sadd.s32 %s225, 1
    %p229 = scmp.eq.s32.totalorder %s18, 1
    %p230 = scmp.ne.s32.totalorder %s225, %s227
    %p231 = scmp.eq.s32.totalorder %s18, 0
    %p232 = por %p230, %p231
    %p233 = scmp.ne.s32.totalorder %s225, %s227
    %p234 = scmp.eq.s32.totalorder %s23, 1
    %p235 = por %p233, %p234
    %p236 = scmp.ne.s32.totalorder %s227, %s228
    %p237 = scmp.eq.s32.totalorder %s23, 0
    %p238 = por %p236, %p237
    %p239 = scmp.ne.s32.totalorder %s227, %s228
    %p240 = scmp.eq.s32.totalorder %s24, 1
    %p241 = por %p239, %p240
    %p243 = scmp.ne.s32.totalorder %s228, %s242
    %p244 = scmp.eq.s32.totalorder %s24, 0
    %p245 = por %p243, %p244
    %s246 = ssub.s32 %s18, %s25
    %p247 = scmp.eq.s32.totalorder %s246, 0
    %s249 = sadd.s32 %s248, 1
    %s250 = scalar_select %p247, %s248, %s249
    %p253 = pneg %p247
    %p254 = scmp.eq.s32.totalorder %s18, 1
    %p255 = por %p253, %p254
    %p256 = scmp.ne.s32.totalorder %s248, %s251
    %p257 = scmp.eq.s32.totalorder %s18, 0
    %p258 = por %p256, %p257
    %p259 = scmp.ne.s32.totalorder %s248, %s251
    %p260 = scmp.eq.s32.totalorder %s23, 1
    %p261 = por %p259, %p260
    %p262 = scmp.ne.s32.totalorder %s251, %s252
    %p263 = scmp.eq.s32.totalorder %s23, 0
    %p264 = por %p262, %p263
    %p265 = scmp.ne.s32.totalorder %s251, %s252
    %p266 = scmp.eq.s32.totalorder %s24, 1
    %p267 = por %p265, %p266
    %p269 = scmp.ne.s32.totalorder %s252, %s268
    %p270 = scmp.eq.s32.totalorder %s24, 0
    %p271 = por %p269, %p270
    %p272 = scmp.le.s32.totalorder 1, %s18
    %p273 = scmp.lt.s32.totalorder %s18, 3
    %p274 = pnand %p272, %p273
    %p275 = pneg %p274
    // Predicated region
    $region9: #{wide_and_deep_forward.1} parent=5 // pred_check
      _
    $region10: #{wide_and_deep_forward.1} parent=5 // pred_check_branch
      %277 = sbr.rel (%p274) target = $region12
    $region11: #{wide_and_deep_forward.1} parent=5 // pred_region
      %s278 = ssub.s32 %s18, 1
      // Predicated region
      $region13: #{wide_and_deep_forward.1} parent=11 // pred_check
        %p279 = pneg %p91
      $region14: #{wide_and_deep_forward.1} parent=11 // pred_check_branch
        %281 = sbr.rel (%p279) target = $region16
      $region15: #{wide_and_deep_forward.1} parent=11 // pred_region
        _
      $region16: #{wide_and_deep_forward.1} parent=11 // pred_fallthru
        _
      // Predicated region
      $region17: #{wide_and_deep_forward.1} parent=11 // pred_check
        %p282 = pneg %p112
      $region18: #{wide_and_deep_forward.1} parent=11 // pred_check_branch
        %284 = sbr.rel (%p282) target = $region20
      $region19: #{wide_and_deep_forward.1} parent=11 // pred_region
        _
      $region20: #{wide_and_deep_forward.1} parent=11 // pred_fallthru
        _
      // Predicated region
      $region21: #{wide_and_deep_forward.1} parent=11 // pred_check
        %p285 = pneg %p133
      $region22: #{wide_and_deep_forward.1} parent=11 // pred_check_branch
        %287 = sbr.rel (%p285) target = $region24
      $region23: #{wide_and_deep_forward.1} parent=11 // pred_region
        _
      $region24: #{wide_and_deep_forward.1} parent=11 // pred_fallthru
        _
      // Predicated region
      $region25: #{wide_and_deep_forward.1} parent=11 // pred_check
        %p288 = pneg %p154
      $region26: #{wide_and_deep_forward.1} parent=11 // pred_check_branch
        %290 = sbr.rel (%p288) target = $region28
      $region27: #{wide_and_deep_forward.1} parent=11 // pred_region
        _
      $region28: #{wide_and_deep_forward.1} parent=11 // pred_fallthru
        _
      // Predicated region
      $region29: #{wide_and_deep_forward.1} parent=11 // pred_check
        %p291 = pneg %p175
      $region30: #{wide_and_deep_forward.1} parent=11 // pred_check_branch
        %293 = sbr.rel (%p291) target = $region32
      $region31: #{wide_and_deep_forward.1} parent=11 // pred_region
        _
      $region32: #{wide_and_deep_forward.1} parent=11 // pred_fallthru
        _
      // Predicated region
      $region33: #{wide_and_deep_forward.1} parent=11 // pred_check
        %p294 = pneg %p196
      $region34: #{wide_and_deep_forward.1} parent=11 // pred_check_branch
        %296 = sbr.rel (%p294) target = $region36
      $region35: #{wide_and_deep_forward.1} parent=11 // pred_region
        _
      $region36: #{wide_and_deep_forward.1} parent=11 // pred_fallthru
        _
      // Predicated region
      $region37: #{wide_and_deep_forward.1} parent=11 // pred_check
        %p297 = pneg %p217
      $region38: #{wide_and_deep_forward.1} parent=11 // pred_check_branch
        %299 = sbr.rel (%p297) target = $region40
      $region39: #{wide_and_deep_forward.1} parent=11 // pred_region
        _
      $region40: #{wide_and_deep_forward.1} parent=11 // pred_fallthru
        _
      // Predicated region
      $region41: #{wide_and_deep_forward.1} parent=11 // pred_check
        %p300 = pneg %p238
      $region42: #{wide_and_deep_forward.1} parent=11 // pred_check_branch
        %302 = sbr.rel (%p300) target = $region44
      $region43: #{wide_and_deep_forward.1} parent=11 // pred_region
        _
      $region44: #{wide_and_deep_forward.1} parent=11 // pred_fallthru
        _
    $region12: #{wide_and_deep_forward.1} parent=5 // pred_fallthru
      _
    %p303 = scmp.lt.s32.totalorder %s18, 2
    // Predicated region
    $region45: #{wide_and_deep_forward.1} parent=5 // pred_check
      %p304 = pneg %p303
    $region46: #{wide_and_deep_forward.1} parent=5 // pred_check_branch
      %306 = sbr.rel (%p304) target = $region48
    $region47: #{wide_and_deep_forward.1} parent=5 // pred_region
      // Predicated region
      $region49: #{wide_and_deep_forward.1} parent=47 // pred_check
        %p307 = pneg %p38
      $region50: #{wide_and_deep_forward.1} parent=47 // pred_check_branch
        %309 = sbr.rel (%p307) target = $region52
      $region51: #{wide_and_deep_forward.1} parent=47 // pred_region
        %s310 = smul.u32 4, %s18
        %p311 = scmp.lt.s32.totalorder %s310, 7
        %s312 = scalar_select %p311, %s310, 7
        %s313 = smul.addr %s312, 8
        %s314 = scalar_lea.vmem %s0, %s313
        %s315 = smul.u32 4, %s18
      $region52: #{wide_and_deep_forward.1} parent=47 // pred_fallthru
        _
      // Predicated region
      $region53: #{wide_and_deep_forward.1} parent=47 // pred_check
        %p316 = pneg %p64
      $region54: #{wide_and_deep_forward.1} parent=47 // pred_check_branch
        %318 = sbr.rel (%p316) target = $region56
      $region55: #{wide_and_deep_forward.1} parent=47 // pred_region
        %s319 = smul.u32 4, %s18
        %p320 = scmp.lt.s32.totalorder %s319, 7
        %s321 = scalar_select %p320, %s319, 7
        %s322 = smul.addr %s321, 4
        %s323 = scalar_lea.vmem %s1, %s322
        %s324 = smul.u32 4, %s18
      $region56: #{wide_and_deep_forward.1} parent=47 // pred_fallthru
        _
    $region48: #{wide_and_deep_forward.1} parent=5 // pred_fallthru
      _
    %p325 = scmp.le.s32.totalorder 1, %s18
    %p326 = scmp.lt.s32.totalorder %s18, 3
    %p327 = pnand %p325, %p326
    %p328 = pneg %p327
    // Predicated region
    $region57: #{wide_and_deep_forward.1} parent=5 // pred_check
      _
    $region58: #{wide_and_deep_forward.1} parent=5 // pred_check_branch
      %330 = sbr.rel (%p327) target = $region60
    $region59: #{wide_and_deep_forward.1} parent=5 // pred_region
      %s331 = ssub.s32 %s18, 1
      %s332 = smul.u32 4, %s23
      %p333 = scmp.lt.s32.totalorder %s332, 7
      %s334 = scalar_select %p333, %s332, 7
      %s335 = smul.addr %s334, 8
      %s336 = scalar_lea.vmem %s0, %s335
      %p337 = pneg %p44
      %p338 = pneg %p41
      %s339 = smul.u32 4, %s23
      %p340 = scmp.lt.s32.totalorder %s339, 7
      %s341 = scalar_select %p340, %s339, 7
      %s342 = smul.addr %s341, 4
      %s343 = scalar_lea.vmem %s1, %s342
      %p344 = pneg %p70
      %p345 = pneg %p67
      %p346 = pneg %p91
      %p347 = pneg %p88
      %p348 = pneg %p112
      %p349 = pneg %p109
      %p350 = pneg %p133
      %p351 = pneg %p130
      %p352 = pneg %p154
      %p353 = pneg %p151
      %p354 = pneg %p175
      %p355 = pneg %p172
      %p356 = pneg %p196
      %p357 = pneg %p193
      %p358 = pneg %p217
      %p359 = pneg %p214
      %p360 = pneg %p238
      %p361 = pneg %p235
      %p362 = pneg %p264
      %p363 = pneg %p261
      %s364 = smul.u32 4, %s23
      %p365 = scmp.lt.s32.totalorder %s364, 7
      %s366 = scalar_select %p365, %s364, 7
      %s367 = smul.addr %s366, 8
      %s368 = scalar_lea.vmem %s10, %s367
      %s369 = smul.u32 4, %s23
      %p370 = scmp.lt.s32.totalorder %s369, 7
      %s371 = scalar_select %p370, %s369, 7
      %s372 = smul.addr %s371, 8
      %s373 = scalar_lea.vmem %s0, %s372
      %s374 = smul.u32 4, %s23
      %s375 = smul.u32 4, %s23
      %p376 = scmp.lt.s32.totalorder %s375, 7
      %s377 = scalar_select %p376, %s375, 7
      %s378 = smul.addr %s377, 4
      %s379 = scalar_lea.vmem %s1, %s378
      %s380 = smul.u32 4, %s23
      %s381 = smul.u32 4, %s23
      %p382 = scmp.lt.s32.totalorder %s381, 7
      %s383 = scalar_select %p382, %s381, 7
      %s384 = smul.addr %s383, 8
      %s385 = scalar_lea.vmem %s10, %s384
      %s386 = smul.u32 4, %s23
      %v388 = vld [vmem:[%s379] sm:$0xf]
      %v389 = vld [vmem:[%s379 + $0x4] sm:$0xf]
      %v390 = vld [vmem:[%s379 + $0x8] sm:$0xf]
      %v391 = vld [vmem:[%s379 + $0xc] sm:$0xf]
      %v392 = vld [vmem:[%s2] sm:$0xf]
      %v393 = vld [vmem:[%s2 + $0x4] sm:$0xf]
      %v394 = vld [vmem:[%s2 + $0x8] sm:$0xf]
      %v395 = vld [vmem:[%s2 + $0xc] sm:$0xf]
      %v396 = vld [vmem:[%s2 + $0x10] sm:$0xf]
      %v397 = vld [vmem:[%s2 + $0x14] sm:$0xf]
      %v398 = vld [vmem:[%s2 + $0x18] sm:$0xf]
      %v399 = vld [vmem:[%s2 + $0x1c] sm:$0xf]
      %v400 = vld [vmem:[%s3] sm:$0x1]
      %v402 = vlaneseq
      %v403 = vshrl.u32 %v402, 7
      %v404 = vsub.s32 0, %v403
      %v405 = vrot.slane %v400, %v404
      %v411 = vunpack.c.l.b16 %v388
      %v412 = vunpack.c.l.b16 %v389
      %v413 = vunpack.c.l.b16 %v390
      %v414 = vunpack.c.l.b16 %v391
      %v415 = vpack.c.b16 %v412, %v411
      %v416 = vpack.c.b16 %v414, %v413
      %v425 = vunpack.c.l.b16 %v392
      %v426 = vunpack.c.l.b16 %v393
      %v427 = vunpack.c.l.b16 %v394
      %v428 = vunpack.c.l.b16 %v395
      %v429 = vunpack.c.l.b16 %v396
      %v430 = vunpack.c.l.b16 %v397
      %v431 = vunpack.c.l.b16 %v398
      %v432 = vunpack.c.l.b16 %v399
      %v433 = vpack.c.b16 %v426, %v425
      %v434 = vpack.c.b16 %v428, %v427
      %v435 = vpack.c.b16 %v430, %v429
      %v436 = vpack.c.b16 %v432, %v431
      %vm441 = vcmask 523264
      %v443 = vsel %vm441, %v415, 0
      %v446 = vsel %vm441, %v416, 0
      %448 = vmatprep.subr.bf16.mxu0 0
      %449 = vmatpush1.bf16.msra.mxu0 0
      %450 = vmatprep.subr.bf16.mxu0 0
      %451 = vmatpush1.bf16.msra.mxu0 0
      %452 = vmatprep.subr.bf16.mxu0 0
      %453 = vmatpush1.bf16.msra.mxu0 0
      %454 = vmatprep.subr.bf16.mxu0 0
      %455 = vmatpush1.bf16.msra.mxu0 0
      %456 = vmatprep.subr.bf16.mxu0 0
      %457 = vmatpush1.bf16.msra.mxu0 %v436
      %458 = vmatprep.subr.bf16.mxu0 0
      %459 = vmatpush1.bf16.msra.mxu0 %v435
      %460 = vmatprep.subr.bf16.mxu0 0
      %461 = vmatpush1.bf16.msra.mxu0 %v434
      %462 = vmatprep.subr.bf16.mxu0 0
      %463 = vmatpush1.bf16.msra.mxu0 %v433
      %464 = vmatprep.subr.bf16.mxu0 0
      %465 = vmatpush2.bf16.msra.mxu0 0
      %466 = vmatprep.subr.bf16.mxu0 0
      %467 = vmatpush2.bf16.msra.mxu0 0
      %468 = vmatprep.subr.bf16.mxu0 0
      %469 = vmatpush2.bf16.msra.mxu0 0
      %470 = vmatprep.subr.bf16.mxu0 0
      %471 = vmatpush2.bf16.msra.mxu0 0
      %472 = vmatprep.subr.bf16.mxu0 0
      %473 = vmatpush2.bf16.msra.mxu0 0
      %474 = vmatprep.subr.bf16.mxu0 0
      %475 = vmatpush2.bf16.msra.mxu0 0
      %476 = vmatprep.subr.bf16.mxu0 0
      %477 = vmatpush2.bf16.msra.mxu0 0
      %478 = vmatprep.subr.bf16.mxu0 0
      %479 = vmatpush2.bf16.msra.mxu0 0
      %480 = vmatprep.mubr.bf16.mxu0 0
      %481 = vmatmul.mubr.bf16.gmra.mxu0 %v443
      %v482 = vpop.f32.mrf.mxu0
      %v483 = vadd.f32 %v405, %v482
      %v484 = vpop.f32.mrf.mxu0
      %v485 = vpop.f32.mrf.mxu0
      %v486 = vadd.f32 %v405, %v485
      %v487 = vpop.f32.mrf.mxu0
      %488 = vmatprep.mubr.bf16.mxu0 0
      %489 = vmatmul.mubr.bf16.gmra.mxu0 %v446
      %v490 = vpop.f32.mrf.mxu0
      %v491 = vadd.f32 %v405, %v490
      %v492 = vpop.f32.mrf.mxu0
      %v493 = vpop.f32.mrf.mxu0
      %v494 = vadd.f32 %v405, %v493
      %v495 = vpop.f32.mrf.mxu0
      %496 = vdwg.mxu0
      %v497 = vmax.f32 %v483, 0.0
      %v498 = vmax.f32 %v486, 0.0
      %v499 = vmax.f32 %v491, 0.0
      %v500 = vmax.f32 %v494, 0.0
      %v501 = vpack.c.bf16 %v498, %v497
      %v502 = vpack.c.bf16 %v500, %v499
      %v503 = vld [vmem:[%s4] sm:$0xf]
      %v504 = vld [vmem:[%s4 + $0x4] sm:$0xf]
      %v505 = vld [vmem:[%s4 + $0x8] sm:$0xf]
      %v506 = vld [vmem:[%s4 + $0xc] sm:$0xf]
      %v507 = vld [vmem:[%s4 + $0x10] sm:$0xf]
      %v508 = vld [vmem:[%s4 + $0x14] sm:$0xf]
      %v509 = vld [vmem:[%s4 + $0x18] sm:$0xf]
      %v510 = vld [vmem:[%s4 + $0x1c] sm:$0xf]
      %v511 = vld [vmem:[%s5] sm:$0x1]
      %v513 = vlaneseq
      %v514 = vshrl.u32 %v513, 7
      %v515 = vsub.s32 0, %v514
      %v516 = vrot.slane %v511, %v515
      %v526 = vunpack.c.l.b16 %v503
      %v527 = vunpack.c.l.b16 %v504
      %v528 = vunpack.c.l.b16 %v505
      %v529 = vunpack.c.l.b16 %v506
      %v530 = vunpack.c.l.b16 %v507
      %v531 = vunpack.c.l.b16 %v508
      %v532 = vunpack.c.l.b16 %v509
      %v533 = vunpack.c.l.b16 %v510
      %v534 = vpack.c.b16 %v527, %v526
      %v535 = vpack.c.b16 %v529, %v528
      %v536 = vpack.c.b16 %v531, %v530
      %v537 = vpack.c.b16 %v533, %v532
      %v543 = vsel %vm441, %v501, 0
      %v546 = vsel %vm441, %v502, 0
      %548 = vmatprep.subr.bf16.mxu0 0
      %549 = vmatpush1.bf16.msra.mxu0 0
      %550 = vmatprep.subr.bf16.mxu0 0
      %551 = vmatpush1.bf16.msra.mxu0 0
      %552 = vmatprep.subr.bf16.mxu0 0
      %553 = vmatpush1.bf16.msra.mxu0 0
      %554 = vmatprep.subr.bf16.mxu0 0
      %555 = vmatpush1.bf16.msra.mxu0 0
      %556 = vmatprep.subr.bf16.mxu0 0
      %557 = vmatpush1.bf16.msra.mxu0 %v537
      %558 = vmatprep.subr.bf16.mxu0 0
      %559 = vmatpush1.bf16.msra.mxu0 %v536
      %560 = vmatprep.subr.bf16.mxu0 0
      %561 = vmatpush1.bf16.msra.mxu0 %v535
      %562 = vmatprep.subr.bf16.mxu0 0
      %563 = vmatpush1.bf16.msra.mxu0 %v534
      %564 = vmatprep.subr.bf16.mxu0 0
      %565 = vmatpush2.bf16.msra.mxu0 0
      %566 = vmatprep.subr.bf16.mxu0 0
      %567 = vmatpush2.bf16.msra.mxu0 0
      %568 = vmatprep.subr.bf16.mxu0 0
      %569 = vmatpush2.bf16.msra.mxu0 0
      %570 = vmatprep.subr.bf16.mxu0 0
      %571 = vmatpush2.bf16.msra.mxu0 0
      %572 = vmatprep.subr.bf16.mxu0 0
      %573 = vmatpush2.bf16.msra.mxu0 0
      %574 = vmatprep.subr.bf16.mxu0 0
      %575 = vmatpush2.bf16.msra.mxu0 0
      %576 = vmatprep.subr.bf16.mxu0 0
      %577 = vmatpush2.bf16.msra.mxu0 0
      %578 = vmatprep.subr.bf16.mxu0 0
      %579 = vmatpush2.bf16.msra.mxu0 0
      %580 = vmatprep.mubr.bf16.mxu0 0
      %581 = vmatmul.mubr.bf16.gmra.mxu0 %v543
      %v582 = vpop.f32.mrf.mxu0
      %v583 = vadd.f32 %v516, %v582
      %v584 = vpop.f32.mrf.mxu0
      %v585 = vpop.f32.mrf.mxu0
      %v586 = vadd.f32 %v516, %v585
      %v587 = vpop.f32.mrf.mxu0
      %588 = vmatprep.mubr.bf16.mxu0 0
      %589 = vmatmul.mubr.bf16.gmra.mxu0 %v546
      %v590 = vpop.f32.mrf.mxu0
      %v591 = vadd.f32 %v516, %v590
      %v592 = vpop.f32.mrf.mxu0
      %v593 = vpop.f32.mrf.mxu0
      %v594 = vadd.f32 %v516, %v593
      %v595 = vpop.f32.mrf.mxu0
      %596 = vdwg.mxu0
      %v597 = vmax.f32 %v583, 0.0
      %v598 = vmax.f32 %v586, 0.0
      %v599 = vmax.f32 %v591, 0.0
      %v600 = vmax.f32 %v594, 0.0
      %v601 = vpack.c.bf16 %v598, %v597
      %v602 = vpack.c.bf16 %v600, %v599
      %v603 = vld [vmem:[%s6] sm:$0xf]
      %v604 = vld [vmem:[%s6 + $0x4] sm:$0xf]
      %v605 = vld [vmem:[%s6 + $0x8] sm:$0xf]
      %v606 = vld [vmem:[%s6 + $0xc] sm:$0xf]
      %v607 = vld [vmem:[%s6 + $0x10] sm:$0xf]
      %v608 = vld [vmem:[%s6 + $0x14] sm:$0xf]
      %v609 = vld [vmem:[%s6 + $0x18] sm:$0xf]
      %v610 = vld [vmem:[%s6 + $0x1c] sm:$0xf]
      %v611 = vld [vmem:[%s7] sm:$0x1]
      %v613 = vlaneseq
      %v614 = vshrl.u32 %v613, 7
      %v615 = vsub.s32 0, %v614
      %v616 = vrot.slane %v611, %v615
      %v626 = vunpack.c.l.b16 %v603
      %v627 = vunpack.c.l.b16 %v604
      %v628 = vunpack.c.l.b16 %v605
      %v629 = vunpack.c.l.b16 %v606
      %v630 = vunpack.c.l.b16 %v607
      %v631 = vunpack.c.l.b16 %v608
      %v632 = vunpack.c.l.b16 %v609
      %v633 = vunpack.c.l.b16 %v610
      %v634 = vpack.c.b16 %v627, %v626
      %v635 = vpack.c.b16 %v629, %v628
      %v636 = vpack.c.b16 %v631, %v630
      %v637 = vpack.c.b16 %v633, %v632
      %v643 = vsel %vm441, %v601, 0
      %v646 = vsel %vm441, %v602, 0
      %648 = vmatprep.subr.bf16.mxu0 0
      %649 = vmatpush1.bf16.msra.mxu0 0
      %650 = vmatprep.subr.bf16.mxu0 0
      %651 = vmatpush1.bf16.msra.mxu0 0
      %652 = vmatprep.subr.bf16.mxu0 0
      %653 = vmatpush1.bf16.msra.mxu0 0
      %654 = vmatprep.subr.bf16.mxu0 0
      %655 = vmatpush1.bf16.msra.mxu0 0
      %656 = vmatprep.subr.bf16.mxu0 0
      %657 = vmatpush1.bf16.msra.mxu0 %v637
      %658 = vmatprep.subr.bf16.mxu0 0
      %659 = vmatpush1.bf16.msra.mxu0 %v636
      %660 = vmatprep.subr.bf16.mxu0 0
      %661 = vmatpush1.bf16.msra.mxu0 %v635
      %662 = vmatprep.subr.bf16.mxu0 0
      %663 = vmatpush1.bf16.msra.mxu0 %v634
      %664 = vmatprep.subr.bf16.mxu0 0
      %665 = vmatpush2.bf16.msra.mxu0 0
      %666 = vmatprep.subr.bf16.mxu0 0
      %667 = vmatpush2.bf16.msra.mxu0 0
      %668 = vmatprep.subr.bf16.mxu0 0
      %669 = vmatpush2.bf16.msra.mxu0 0
      %670 = vmatprep.subr.bf16.mxu0 0
      %671 = vmatpush2.bf16.msra.mxu0 0
      %672 = vmatprep.subr.bf16.mxu0 0
      %673 = vmatpush2.bf16.msra.mxu0 0
      %674 = vmatprep.subr.bf16.mxu0 0
      %675 = vmatpush2.bf16.msra.mxu0 0
      %676 = vmatprep.subr.bf16.mxu0 0
      %677 = vmatpush2.bf16.msra.mxu0 0
      %678 = vmatprep.subr.bf16.mxu0 0
      %679 = vmatpush2.bf16.msra.mxu0 0
      %680 = vmatprep.mubr.bf16.mxu0 0
      %681 = vmatmul.mubr.bf16.gmra.mxu0 %v643
      %v682 = vpop.f32.mrf.mxu0
      %v683 = vadd.f32 %v616, %v682
      %v684 = vpop.f32.mrf.mxu0
      %v685 = vpop.f32.mrf.mxu0
      %v686 = vadd.f32 %v616, %v685
      %v687 = vpop.f32.mrf.mxu0
      %688 = vmatprep.mubr.bf16.mxu0 0
      %689 = vmatmul.mubr.bf16.gmra.mxu0 %v646
      %v690 = vpop.f32.mrf.mxu0
      %v691 = vadd.f32 %v616, %v690
      %v692 = vpop.f32.mrf.mxu0
      %v693 = vpop.f32.mrf.mxu0
      %v694 = vadd.f32 %v616, %v693
      %v695 = vpop.f32.mrf.mxu0
      %696 = vdwg.mxu0
      %v697 = vmax.f32 %v683, 0.0
      %v698 = vmax.f32 %v686, 0.0
      %v699 = vmax.f32 %v691, 0.0
      %v700 = vmax.f32 %v694, 0.0
      %v701 = vld [vmem:[%s8] sm:$0x1]
      %v703 = vlaneseq
      %v704 = vshrl.u32 %v703, 7
      %v705 = vsub.s32 0, %v704
      %v706 = vrot.slane %v701, %v705
      %v708 = vmul.f32 %v697, %v706
      %v709 = vmul.f32 %v698, %v706
      %v710 = vmul.f32 %v699, %v706
      %v711 = vmul.f32 %v700, %v706
      %v712 = vsel %vm441, %v708, 0.0
      %713 = vadd.xlane.f32.xlu0 %v712
      %v714 = vpop.xlane.xlu0 %713
      %v715 = vsel %vm441, %v709, 0.0
      %716 = vadd.xlane.f32.xlu0 %v715
      %v717 = vpop.xlane.xlu0 %716
      %v718 = vsel %vm441, %v710, 0.0
      %719 = vadd.xlane.f32.xlu0 %v718
      %v720 = vpop.xlane.xlu0 %719
      %v721 = vsel %vm441, %v711, 0.0
      %722 = vadd.xlane.f32.xlu0 %v721
      %v723 = vpop.xlane.xlu0 %722
      %v724 = vld [vmem:[#allocation2] sm:$0x1]
      %v726 = vlaneseq
      %v727 = vshrl.u32 %v726, 7
      %v728 = vsub.s32 0, %v727
      %v729 = vrot.slane %v724, %v728
      %v731 = vadd.f32 %v714, %v729
      %v732 = vadd.f32 %v717, %v729
      %v733 = vadd.f32 %v720, %v729
      %v734 = vadd.f32 %v723, %v729
      %v735 = vld [vmem:[%s373] sm:$0xff]
      %v736 = vld [vmem:[%s373 + $0x8] sm:$0xff]
      %v737 = vld [vmem:[%s373 + $0x10] sm:$0xff]
      %v738 = vld [vmem:[%s373 + $0x18] sm:$0xff]
      %v739 = vadd.f32 %v735, %v731
      %v740 = vadd.f32 %v736, %v732
      %v741 = vadd.f32 %v737, %v733
      %v742 = vadd.f32 %v738, %v734
      %vm743 = vcmask 7168
      %744 = vst.msk [vmem:[%s385] sm:$0xff] %vm743, %v739
      %745 = vst.msk [vmem:[%s385 + $0x8] sm:$0xff] %vm743, %v740
      %746 = vst.msk [vmem:[%s385 + $0x10] sm:$0xff] %vm743, %v741
      %747 = vst.msk [vmem:[%s385 + $0x18] sm:$0xff] %vm743, %v742
      %s748 = smul.u32 4, %s23
      %p749 = scmp.lt.s32.totalorder %s748, 7
      %s750 = scalar_select %p749, %s748, 7
      %s751 = smul.addr %s750, 8
      %s752 = scalar_lea.vmem %s10, %s751
      // Predicated region
      $region61: #{wide_and_deep_forward.1} parent=59 // pred_check
        %p753 = pneg %p261
      $region62: #{wide_and_deep_forward.1} parent=59 // pred_check_branch
        %755 = sbr.rel (%p753) target = $region64
      $region63: #{wide_and_deep_forward.1} parent=59 // pred_region
        %s756 = smul.u32 4, %s23
      $region64: #{wide_and_deep_forward.1} parent=59 // pred_fallthru
        _
    $region60: #{wide_and_deep_forward.1} parent=5 // pred_fallthru
      _
    %p757 = scmp.le.s32.totalorder 2, %s18
    // Predicated region
    $region65: #{wide_and_deep_forward.1} parent=5 // pred_check
      %p758 = pneg %p757
    $region66: #{wide_and_deep_forward.1} parent=5 // pred_check_branch
      %760 = sbr.rel (%p758) target = $region68
    $region67: #{wide_and_deep_forward.1} parent=5 // pred_region
      %s761 = ssub.s32 %s18, 2
      // Predicated region
      $region69: #{wide_and_deep_forward.1} parent=67 // pred_check
        %p762 = pneg %p267
      $region70: #{wide_and_deep_forward.1} parent=67 // pred_check_branch
        %764 = sbr.rel (%p762) target = $region72
      $region71: #{wide_and_deep_forward.1} parent=67 // pred_region
        %s765 = smul.u32 4, %s24
        %p766 = scmp.lt.s32.totalorder %s765, 7
        %s767 = scalar_select %p766, %s765, 7
        %s768 = smul.addr %s767, 8
        %s769 = scalar_lea.vmem %s10, %s768
      $region72: #{wide_and_deep_forward.1} parent=67 // pred_fallthru
        _
    $region68: #{wide_and_deep_forward.1} parent=5 // pred_fallthru
      _
  $region6: #{wide_and_deep_forward.1} parent=0 // loop_footer
    %s22 = sadd.s32 1, %s18
  $region7: #{wide_and_deep_forward.1} parent=0 // loop_footer_branch
    %17 = sbr.rel target = $region3
  $region8: #{wide_and_deep_forward.1} parent=0 // loop_exit
    _

</llo_original>
